<compile_context>
chip_gen: v6e
topology: v6e:2x2x1
jax: 0.10.0
libtpu: 0.0.40
codegen_flags: <defaults>
</compile_context>

<pallas_src>
import math
import numpy as np
import jax
import jax.numpy as jnp
from jax.experimental import pallas as pl
from jax.experimental.pallas import tpu as pltpu


# ---------------------------------------------------------------------------
# Parameter construction (glue, plain numpy/JAX) — mirrors the PyTorch module.
# ---------------------------------------------------------------------------
def xavier_normal(key, kh, kw):
    # nn.init.xavier_normal_ on a (kh, kw) tensor: fan_in=kw, fan_out=kh
    std = math.sqrt(2.0 / (kh + kw))
    return jax.random.normal(key, (kh, kw), dtype=jnp.float32) * std


def _round_up(n, m):
    return ((n + m - 1) // m) * m


def build_compact_params(kernel_weights, bias, *, in_h, in_w, ph, pw,
                         sh, sw, kh, kw, nkh, nkw):
    """Compact (sparsity-exploiting) parameters.

    Returns:
      idx    : int32 [Rp, Kp]  flat pixel index into the UNPADDED image per tap
      wc     : f32   [Rp, Kp]  per-kernel tap weights (0 where the tap hits padding)
      bias_p : f32   [1,  Kp]  bias, zero-padded to the lane-dense Kp
    where R = kh*kw (padded to a multiple of 8) and Kp = nkh*nkw padded to 128.
    """
    K = nkh * nkw
    R = kh * kw
    Kp = _round_up(K, 128)
    Rp = _round_up(R, 8)

    idx = np.zeros((Rp, Kp), dtype=np.int32)
    wc = np.zeros((Rp, Kp), dtype=np.float32)
    kern = np.stack([np.asarray(w) for w in kernel_weights])  # [K, kh, kw]

    for i in range(K):
        pr0 = (i // nkw) * sh          # window start row in padded coords
        pc0 = (i % nkw) * sw           # window start col in padded coords
        for r in range(R):
            pr = pr0 + r // kw
            pc = pc0 + r % kw
            ur, uc = pr - ph, pc - pw  # unpadded coords
            if 0 <= ur < in_h and 0 <= uc < in_w:
                idx[r, i] = ur * in_w + uc
                wc[r, i] = kern[i, r // kw, r % kw]
            # else: tap lands on zero padding -> contributes 0; keep idx=0, wc=0

    bias_p = np.zeros((1, Kp), dtype=np.float32)
    bias_p[0, :K] = np.asarray(bias).reshape(-1)
    return jnp.asarray(idx), jnp.asarray(wc), jnp.asarray(bias_p)


def create_dense_weight_matrix_reference(kernel_weights, in_h, in_w, ph, pw,
                                         sh, sw, kh, kw, nkh, nkw):
    """Exact numpy port of LocallyConnected2dV2._create_weight_matrix.
    Reference/self-check ONLY — the Pallas path never builds this dense matrix."""
    P = (in_h + 2 * ph) * (in_w + 2 * pw)
    K = nkh * nkw
    W = np.zeros((P, K), dtype=np.float32)
    for i in range(K):
        weight = np.asarray(kernel_weights[i])
        start_i = (i // nkw) * sh
        start_j = (i % nkw) * sw
        for k in range(kh):
            begin = (in_w + 2 * pw) * start_i + start_j
            W[begin:begin + kw, i] = weight[k, :]
            start_i += 1
    return W


# ---------------------------------------------------------------------------
# Pallas kernel: out[b, k] = sum_r patches[b, r, k] * Wc[r, k] + bias[k]
# ---------------------------------------------------------------------------
def _lc2d_kernel(patch_ref, w_ref, b_ref, o_ref):
    # patch_ref: [tb, Rp, tn]  gathered receptive-field taps
    # w_ref:     [Rp, tn]      compact weights (zero on padding taps)
    # b_ref:     [1, tn]
    # o_ref:     [tb, tn]      lane-dense (tn multiple of 128)
    taps = patch_ref[...]
    w = w_ref[...]
    acc = jnp.sum(taps * w[None, :, :], axis=1)   # VPU multiply + sublane reduce
    o_ref[...] = acc + b_ref[...]                 # bias added once per tile


def locally_connected_2d_v2(x, idx, wc, bias_p, *, in_h, in_w, nkh, nkw,
                            block_b=8, block_k=128):
    """x: [B, H, W] f32 -> out: [B, nkh, nkw] f32 (same semantics as the PyTorch forward)."""
    B = x.shape[0]
    assert x.shape[1] == in_h and x.shape[2] == in_w
    K = nkh * nkw
    Rp, Kp = wc.shape
    assert Kp % block_k == 0

    x_flat = x.reshape(B, in_h * in_w)
    # Gather the kh*kw taps of every receptive field (XLA gather; this replaces
    # both F.pad and the dense x_pad @ W — padding taps were folded into wc).
    patches = jnp.take(x_flat, idx, axis=1)        # [B, Rp, Kp]

    tb = min(block_b, B)
    grid = (pl.cdiv(B, tb), Kp // block_k)

    out = pl.pallas_call(
        _lc2d_kernel,
        out_shape=jax.ShapeDtypeStruct((B, Kp), jnp.float32),
        grid_spec=pltpu.PrefetchScalarGridSpec(
            num_scalar_prefetch=0,
            grid=grid,
            in_specs=[
                pl.BlockSpec((tb, Rp, block_k), lambda b, j: (b, 0, j)),
                pl.BlockSpec((Rp, block_k), lambda b, j: (0, j)),
                pl.BlockSpec((1, block_k), lambda b, j: (0, j)),
            ],
            out_specs=pl.BlockSpec((tb, block_k), lambda b, j: (b, j)),
        ),
        compiler_params=pltpu.CompilerParams(
            # Both grid axes are independent -> both TensorCores on v7x get work.
            dimension_semantics=("parallel", "parallel"),
        ),
    )(patches, wc, bias_p)

    # Un-pad K and reshape outside the kernel (keeps the store path lane-dense).
    return out[:, :K].reshape(B, nkh, nkw)


# ---------------------------------------------------------------------------
# Demo / self-check
# ---------------------------------------------------------------------------
if __name__ == "__main__":
    # Module hyperparameters (LayerInputParams)
    in_h, in_w = 16, 16          # in_dims
    kh, kw = 3, 3                # kernel_dims
    sh, sw = 2, 2                # stride
    ph, pw = 1, 1                # padding
    nkh, nkw = 8, 8              # num_kernels_out
    num_kernels = nkh * nkw
    B = 2

    key = jax.random.PRNGKey(0)
    key_x, *key_w = jax.random.split(key, 1 + num_kernels)

    # Deterministic parameter init (xavier_normal per kernel weight, zero bias).
    kernel_weights = [xavier_normal(k, kh, kw) for k in key_w]
    bias = jnp.zeros((nkh, nkw), dtype=jnp.float32)

    idx, wc, bias_p = build_compact_params(
        kernel_weights, bias, in_h=in_h, in_w=in_w, ph=ph, pw=pw,
        sh=sh, sw=sw, kh=kh, kw=kw, nkh=nkh, nkw=nkw)

    x = jax.random.normal(key_x, (B, in_h, in_w), dtype=jnp.float32)

    out = locally_connected_2d_v2(
        x, idx, wc, bias_p, in_h=in_h, in_w=in_w, nkh=nkh, nkw=nkw)
    out = jax.block_until_ready(out)

    # Reference: exact numpy port of the PyTorch forward (pad -> flatten -> dense W matmul -> bias).
    W_dense = create_dense_weight_matrix_reference(
        kernel_weights, in_h, in_w, ph, pw, sh, sw, kh, kw, nkh, nkw)
    x_np = np.asarray(x)
    x_pad = np.pad(x_np, ((0, 0), (ph, ph), (pw, pw)))
    ref = (x_pad.reshape(B, -1) @ W_dense).reshape(B, nkh, nkw) + np.asarray(bias)

    assert out.shape == (B, nkh, nkw)
    np.testing.assert_allclose(np.asarray(out), ref, rtol=1e-5, atol=1e-5)

    print("KERNEL_OK")
</pallas_src>

<mosaic_0001>
module attributes {stable_mosaic.version = 11 : i64} {
  func.func @_lc2d_kernel(%arg0: i32, %arg1: i32, %arg2: memref<2x16x128xf32, #tpu.memory_space<vmem>>, %arg3: memref<16x128xf32, #tpu.memory_space<vmem>>, %arg4: memref<1x128xf32, #tpu.memory_space<vmem>>, %arg5: memref<2x128xf32, #tpu.memory_space<vmem>>) attributes {dimension_semantics = [#tpu.dimension_semantics<parallel>, #tpu.dimension_semantics<parallel>], iteration_bounds = array<i64: 1, 1>, scalar_prefetch = 0 : i64, scratch_operands = 0 : i64, tpu.core_type = #tpu.core_type<tc>, window_params = [{transform_indices = @transform_0, window_bounds = array<i64: 2, 16, 128>}, {transform_indices = @transform_1, window_bounds = array<i64: 16, 128>}, {transform_indices = @transform_2, window_bounds = array<i64: 1, 128>}, {transform_indices = @transform_3, window_bounds = array<i64: 2, 128>}]} {
    %c0 = arith.constant 0 : index
    %c0_0 = arith.constant 0 : index
    %c0_1 = arith.constant 0 : index
    %0 = vector.load %arg2[%c0, %c0_0, %c0_1] : memref<2x16x128xf32, #tpu.memory_space<vmem>>, vector<2x16x128xf32>
    %c0_2 = arith.constant 0 : index
    %c0_3 = arith.constant 0 : index
    %1 = vector.load %arg3[%c0_2, %c0_3] : memref<16x128xf32, #tpu.memory_space<vmem>>, vector<16x128xf32>
    %2 = vector.shape_cast %1 : vector<16x128xf32> to vector<1x16x128xf32>
    %3 = vector.broadcast %2 : vector<1x16x128xf32> to vector<2x16x128xf32>
    %4 = arith.mulf %0, %3 : vector<2x16x128xf32>
    %cst = arith.constant dense<0.000000e+00> : vector<2x128xf32>
    %5 = vector.multi_reduction <add>, %4, %cst [1] : vector<2x16x128xf32> to vector<2x128xf32>
    %c0_4 = arith.constant 0 : index
    %c0_5 = arith.constant 0 : index
    %6 = vector.load %arg4[%c0_4, %c0_5] : memref<1x128xf32, #tpu.memory_space<vmem>>, vector<1x128xf32>
    %7 = vector.broadcast %6 : vector<1x128xf32> to vector<2x128xf32>
    %8 = arith.addf %5, %7 : vector<2x128xf32>
    %c0_6 = arith.constant 0 : index
    %c0_7 = arith.constant 0 : index
    %9 = vector.load %arg5[%c0_6, %c0_7] : memref<2x128xf32, #tpu.memory_space<vmem>>, vector<2x128xf32>
    tpu.vector_store %arg5[%c0_6, %c0_7], %8 {strides = array<i32>} : memref<2x128xf32, #tpu.memory_space<vmem>>, vector<2x128xf32>,
    return
  }
  func.func @transform_0(%arg0: i32, %arg1: i32) -> (i32, i32, i32) {
    %c0_i32 = arith.constant 0 : i32
    %c0_i32_0 = arith.constant 0 : i32
    return %arg0, %c0_i32, %arg1 : i32, i32, i32
  }
  func.func @transform_1(%arg0: i32, %arg1: i32) -> (i32, i32) {
    %c0_i32 = arith.constant 0 : i32
    %c0_i32_0 = arith.constant 0 : i32
    return %c0_i32, %arg1 : i32, i32
  }
  func.func @transform_2(%arg0: i32, %arg1: i32) -> (i32, i32) {
    %c0_i32 = arith.constant 0 : i32
    %c0_i32_0 = arith.constant 0 : i32
    return %c0_i32, %arg1 : i32, i32
  }
  func.func @transform_3(%arg0: i32, %arg1: i32) -> (i32, i32) {
    %c0_i32 = arith.constant 0 : i32
    return %arg0, %arg1 : i32, i32
  }
}

</mosaic_0001>

<llo_original>
// kernel: tpu_custom_call.1
$region0: #{tpu_custom_call.1}
  #allocation0 [shape = 'u32[]', space=smem, size = 0x4, offset = 0x4, fixed_abs, tag = 'smem constant byte address 0x4 - core index']
  #allocation1 [shape = 'u32[144,128]{1,0:T(1,128)}', space=vmem, size = 0x12000, scoped, tag = 'internal scratch']
  %s0 = inlined_call_operand.hbm [shape: f32[2,16,128], index: 0, kind: input, shape index: {}]
  %s1 = inlined_call_operand.hbm [shape: f32[16,128], index: 1, kind: input, shape index: {}]
  %s2 = inlined_call_operand.vmem [shape: f32[1,128], index: 2, kind: input, shape index: {}]
  %s3 = inlined_call_operand.hbm [shape: f32[2,128], index: 3, kind: output, shape index: {}]
  %s4 = sld [smem:[#allocation0]]
  $region30: #{tpu_custom_call.1} parent=0
    _
  %s6 = ssub.s32 1, %s4
  %s7 = scalar_select 0, %s6, %s4
  $region1: #{tpu_custom_call.1} parent=0
    #allocation2 [shape = 'u8[16384]{0}', space=vmem, size = 0x4000, scoped, tag = 'input window, operand 0, single buffered']
    #allocation3 [shape = 's32[1]{0}', space=sflag, size = 0x4, scoped, tag = 'scoped memory for tpu_custom_call.1']
    #allocation4 [shape = 's32[1]{0}', space=sflag, size = 0x4, scoped, tag = 'scoped memory for tpu_custom_call.1']
    #allocation5 [shape = 'u8[8192]{0}', space=vmem, size = 0x2000, scoped, tag = 'input window, operand 1, single buffered']
    #allocation6 [shape = 's32[1]{0}', space=sflag, size = 0x4, scoped, tag = 'scoped memory for tpu_custom_call.1']
    #allocation7 [shape = 'u8[1024]{0}', space=vmem, size = 0x400, scoped, tag = 'output window, operand 0, single buffered']
    %8 = vsyncpa [#allocation3], 0
    %9 = vsyncpa [#allocation6], 0
    %10 = vsyncpa [#allocation4], 0
    // Predicated region
    $region2: #{tpu_custom_call.1} parent=1 // pred_check
      _
    $region3: #{tpu_custom_call.1} parent=1 // pred_check_branch
      %12 = sbr.rel (0) target = $region5
    $region4: #{tpu_custom_call.1} parent=1 // pred_region
      %s14 = ssub.s32 512, 512
      %15 = vsyncadd [#allocation3], %s14
      %s16 = sshll.u32 [#allocation2], 4
      %s17 = int_to_ptr.vmem [resolvable:$true] %s16
      %22 = dma.hbm_to_vmem [thread:$0]  %s0, 512, %s17, [#allocation3], 128, 128, 8
    $region5: #{tpu_custom_call.1} parent=1 // pred_fallthru
      _
    // Predicated region
    $region6: #{tpu_custom_call.1} parent=1 // pred_check
      _
    $region7: #{tpu_custom_call.1} parent=1 // pred_check_branch
      %24 = sbr.rel (0) target = $region9
    $region8: #{tpu_custom_call.1} parent=1 // pred_region
      %s26 = ssub.s32 256, 256
      %27 = vsyncadd [#allocation6], %s26
      %s28 = sshll.u32 [#allocation5], 4
      %s29 = int_to_ptr.vmem [resolvable:$true] %s28
      %34 = dma.hbm_to_vmem [thread:$0]  %s1, 256, %s29, [#allocation6], 128, 128, 8
    $region9: #{tpu_custom_call.1} parent=1 // pred_fallthru
      _
    // Predicated region
    $region10: #{tpu_custom_call.1} parent=1 // pred_check
      _
    $region11: #{tpu_custom_call.1} parent=1 // pred_check_branch
      %36 = sbr.rel (0) target = $region13
    $region12: #{tpu_custom_call.1} parent=1 // pred_region
      _
    $region13: #{tpu_custom_call.1} parent=1 // pred_fallthru
      _
    // Predicated region
    $region14: #{tpu_custom_call.1} parent=1 // pred_check
      _
    $region15: #{tpu_custom_call.1} parent=1 // pred_check_branch
      %38 = sbr.rel (0) target = $region17
    $region16: #{tpu_custom_call.1} parent=1 // pred_region
      %39 = dma.done [#allocation3], 512
    $region17: #{tpu_custom_call.1} parent=1 // pred_fallthru
      _
    // Predicated region
    $region18: #{tpu_custom_call.1} parent=1 // pred_check
      _
    $region19: #{tpu_custom_call.1} parent=1 // pred_check_branch
      %41 = sbr.rel (0) target = $region21
    $region20: #{tpu_custom_call.1} parent=1 // pred_region
      %42 = dma.done [#allocation6], 256
    $region21: #{tpu_custom_call.1} parent=1 // pred_fallthru
      _
    %v43 = vld [vmem:[#allocation2] sm:$0xff]
    %v44 = vld [vmem:[#allocation2 + $0x8] sm:$0xff]
    %v45 = vld [vmem:[#allocation2 + $0x10] sm:$0xff]
    %v46 = vld [vmem:[#allocation2 + $0x18] sm:$0xff]
    %v47 = vld [vmem:[#allocation5] sm:$0xff]
    %v48 = vld [vmem:[#allocation5 + $0x8] sm:$0xff]
    %v49 = vmul.f32 %v43, %v47
    %v50 = vmul.f32 %v44, %v48
    %v51 = vmul.f32 %v45, %v47
    %v52 = vmul.f32 %v46, %v48
    %v53 = vadd.f32 %v49, %v50
    %v54 = vrot.slane %v53, 4
    %v55 = vadd.f32 %v53, %v54
    %v56 = vrot.slane %v55, 2
    %v57 = vadd.f32 %v55, %v56
    %v58 = vrot.slane %v57, 1
    %v59 = vadd.f32 %v57, %v58
    %v60 = vadd.f32 %v51, %v52
    %v61 = vrot.slane %v60, 4
    %v62 = vadd.f32 %v60, %v61
    %v63 = vrot.slane %v62, 2
    %v64 = vadd.f32 %v62, %v63
    %v65 = vrot.slane %v64, 1
    %v66 = vadd.f32 %v64, %v65
    %v67 = vld [vmem:[%s2] sm:$0x1]
    %v69 = vlaneseq
    %v70 = vshrl.u32 %v69, 7
    %v71 = vsub.s32 0, %v70
    %v72 = vrot.slane %v67, %v71
    %v74 = vadd.f32 %v59, %v72
    %v75 = vadd.f32 %v66, %v72
    %v78 = vrot.slane %v75, 7
    %vm79 = vcmask 1041409
    %v80 = vsel %vm79, %v78, %v74
    %82 = vst [vmem:[#allocation7] sm:$0x3] %v80
    // Predicated region
    $region22: #{tpu_custom_call.1} parent=1 // pred_check
      _
    $region23: #{tpu_custom_call.1} parent=1 // pred_check_branch
      %84 = sbr.rel (0) target = $region25
    $region24: #{tpu_custom_call.1} parent=1 // pred_region
      %s86 = ssub.s32 32, 32
      %87 = vsyncadd [#allocation4], %s86
      %s89 = sshll.u32 [#allocation7], 4
      %s90 = int_to_ptr.vmem [resolvable:$true] %s89
      %92 = dma.vmem_to_hbm [thread:$0]  %s90, 32, %s3, [#allocation4]
    $region25: #{tpu_custom_call.1} parent=1 // pred_fallthru
      _
    // Predicated region
    $region26: #{tpu_custom_call.1} parent=1 // pred_check
      _
    $region27: #{tpu_custom_call.1} parent=1 // pred_check_branch
      %94 = sbr.rel (0) target = $region29
    $region28: #{tpu_custom_call.1} parent=1 // pred_region
      %95 = dma.done [#allocation4], 32
    $region29: #{tpu_custom_call.1} parent=1 // pred_fallthru
      _
    %96 = vsyncpa [#allocation3], 1
    %97 = vsyncpa [#allocation6], 1
    %98 = vsyncpa [#allocation4], 1

</llo_original>
